<compile_context>
chip_gen: v7x
topology: tpu7x:2x2x1
jax: 0.10.0
libtpu: 0.0.40
codegen_flags: <defaults>
</compile_context>

<pallas_src>
import functools

import jax
import jax.numpy as jnp
from jax import lax
from jax.experimental import pallas as pl
from jax.experimental.pallas import tpu as pltpu

PRIME_DIMS = [11, 13, 17, 19, 23]
LN_EPS = 1e-5
_LANE = 128
_PIPELINE_VMEM_BUDGET = 24 << 20  # bytes for the double-buffered x/out tiles


def _round_up(a, b):
    return (a + b - 1) // b * b


def _sublane(dtype):
    # Native sublane tiling: 8 rows for 4-byte, 16 for 2-byte, 32 for 1-byte.
    return max(8, 32 // jnp.dtype(dtype).itemsize)


def _choose_tile_m(M, E, P_pad, x_dtype, out_dtype, tile_m):
    sub = max(_sublane(x_dtype), _sublane(out_dtype))
    isx = jnp.dtype(x_dtype).itemsize
    iso = jnp.dtype(out_dtype).itemsize
    # Double-buffered x tile + double-buffered out tile per row.
    per_row = 2 * E * isx + 2 * P_pad * iso
    tm = min(int(tile_m), max(sub, _PIPELINE_VMEM_BUDGET // per_row))
    # v7x megacore: keep >= 2 grid steps for moderate M so both TCs get work.
    if M > sub:
        tm = min(tm, _round_up(-(-M // 2), sub))
    tm = min(tm, _round_up(M, sub))
    return max(sub, (tm // sub) * sub)


def _vmem_limit_bytes(tm, E, P_pad, x_dtype, out_dtype, w_dtype):
    need = (
        2 * tm * E * jnp.dtype(x_dtype).itemsize          # x double buffer
        + 2 * tm * P_pad * jnp.dtype(out_dtype).itemsize  # out double buffer
        + 2 * E * P_pad * jnp.dtype(w_dtype).itemsize     # resident weights
        + 2 * 4 * P_pad * 4                                # packed params (f32)
        + (1 << 20)                                        # slack
    )
    return int(min(96 << 20, max(32 << 20, need * 5 // 4)))


def _prime_proj_kernel(x_ref, w_ref, params_ref, o_ref, *, p_real, eps):
    # x_ref:      (tm, E)      tile of flattened tokens (native dtype; bf16 ok)
    # w_ref:      (E, P_pad)   concatenated projection weights, zero-padded lanes
    # params_ref: (4, P_pad)   f32 rows: [bias, ln_gamma, ln_beta, lane_mask]
    # o_ref:      (tm, P_pad)  lane-dense output tile
    y = jnp.dot(x_ref[...], w_ref[...], preferred_element_type=jnp.float32)

    bias = params_ref[0:1, :]
    gamma = params_ref[1:2, :]
    beta = params_ref[2:3, :]
    mask = params_ref[3:4, :]

    y = y + bias  # padded lanes stay exactly 0 (weight & bias pads are 0)

    # LayerNorm over the first p_real lanes (population variance, like torch).
    inv_p = 1.0 / p_real
    mean = jnp.sum(y, axis=-1, keepdims=True) * inv_p      # pad lanes are 0
    centered = (y - mean) * mask                            # exclude pads from var
    var = jnp.sum(centered * centered, axis=-1, keepdims=True) * inv_p
    y_hat = centered * lax.rsqrt(var + eps)

    o_ref[...] = (y_hat * gamma + beta).astype(o_ref.dtype)


def prepare_params(w_cat, b_cat, gamma, beta):
    """One-time prep: pad W lanes to 128 and pack f32 [bias, gamma, beta, mask].

    Call once at init; pass the results to `prime_projection_encoder` so the
    padding/packing is not redone (and re-materialized in HBM) on every call.
    """
    E, P = w_cat.shape
    P_pad = _round_up(P, _LANE)
    w_pad = jnp.pad(w_cat, ((0, 0), (0, P_pad - P)))
    lane_mask = (jnp.arange(P_pad) < P).astype(jnp.float32)
    params = jnp.stack(
        [
            jnp.pad(b_cat.reshape(-1).astype(jnp.float32), (0, P_pad - P)),
            jnp.pad(gamma.reshape(-1).astype(jnp.float32), (0, P_pad - P)),
            jnp.pad(beta.reshape(-1).astype(jnp.float32), (0, P_pad - P)),
            lane_mask,
        ],
        axis=0,
    )
    return w_pad, params, P


@functools.partial(jax.jit, static_argnames=("p_real", "tile_m", "return_padded"))
def prime_projection_encoder(x, w_pad, params, *, p_real, tile_m=1024,
                             return_padded=False):
    """x: [B, E] or [B, S, E]; returns [..., p_real] (or [..., 128] if padded)."""
    orig_shape = x.shape
    E, P_pad = w_pad.shape
    x2 = x.reshape(-1, E)
    M = x2.shape[0]

    tm = _choose_tile_m(M, E, P_pad, x2.dtype, x2.dtype, tile_m)
    grid_m = pl.cdiv(M, tm)  # no row padding: partial last block is masked

    kernel = functools.partial(_prime_proj_kernel, p_real=p_real, eps=LN_EPS)

    out = pl.pallas_call(
        kernel,
        out_shape=jax.ShapeDtypeStruct((M, P_pad), x.dtype),
        grid_spec=pltpu.PrefetchScalarGridSpec(
            num_scalar_prefetch=0,
            grid=(grid_m,),
            in_specs=[
                pl.BlockSpec((tm, E), lambda i: (i, 0)),
                pl.BlockSpec((E, P_pad), lambda i: (0, 0)),   # resident weights
                pl.BlockSpec((4, P_pad), lambda i: (0, 0)),   # resident params
            ],
            out_specs=pl.BlockSpec((tm, P_pad), lambda i: (i, 0)),
        ),
        compiler_params=pltpu.CompilerParams(
            dimension_semantics=("parallel",),
            vmem_limit_bytes=_vmem_limit_bytes(tm, E, P_pad, x2.dtype, x.dtype,
                                               w_pad.dtype),
        ),
    )(x2, w_pad, params)

    p_out = P_pad if return_padded else p_real
    if not return_padded:
        out = out[:, :p_real]  # lane slice only; pass return_padded=True to fuse
    if len(orig_shape) == 3:
        out = out.reshape(orig_shape[0], orig_shape[1], p_out)
    return out


def init_params(key, embedding_dim, prime_dims=PRIME_DIMS, dtype=jnp.float32):
    """Deterministic synthetic parameters (shapes match the PyTorch module)."""
    ws, bs = [], []
    k = key
    for p in prime_dims:
        k, kw, kb = jax.random.split(k, 3)
        bound = 1.0 / jnp.sqrt(embedding_dim)
        # nn.Linear weight is (out, in); store transposed (in, out) blocks.
        w = jax.random.uniform(kw, (embedding_dim, p), dtype, -bound, bound)
        b = jax.random.uniform(kb, (p,), dtype, -bound, bound)
        ws.append(w)
        bs.append(b)
    w_cat = jnp.concatenate(ws, axis=1)            # (E, P)
    b_cat = jnp.concatenate(bs, axis=0)[None, :]   # (1, P)
    P = sum(prime_dims)
    gamma = jnp.ones((1, P), dtype)                # LayerNorm weight init
    beta = jnp.zeros((1, P), dtype)                # LayerNorm bias init
    return w_cat, b_cat, gamma, beta


def _reference(x, w_cat, b_cat, gamma, beta):
    orig_shape = x.shape
    x2 = x.reshape(-1, orig_shape[-1]).astype(jnp.float32)
    y = x2 @ w_cat.astype(jnp.float32) + b_cat.astype(jnp.float32).reshape(1, -1)
    mean = jnp.mean(y, axis=-1, keepdims=True)
    var = jnp.mean((y - mean) ** 2, axis=-1, keepdims=True)
    y = (y - mean) / jnp.sqrt(var + LN_EPS)
    y = y * gamma.reshape(1, -1) + beta.reshape(1, -1)
    if len(orig_shape) == 3:
        y = y.reshape(orig_shape[0], orig_shape[1], -1)
    return y


if __name__ == "__main__":
    batch, seq, embedding_dim = 2, 8, 32
    P = sum(PRIME_DIMS)
    key = jax.random.PRNGKey(0)
    kx, kp, kx2 = jax.random.split(key, 3)

    x = jax.random.normal(kx, (batch, seq, embedding_dim), jnp.float32)
    w_cat, b_cat, gamma, beta = init_params(kp, embedding_dim)
    w_pad, params, p_real = prepare_params(w_cat, b_cat, gamma, beta)

    # f32 path, 3-D input.
    out = prime_projection_encoder(x, w_pad, params, p_real=p_real)
    out = jax.block_until_ready(out)
    ref = _reference(x, w_cat, b_cat, gamma, beta)
    assert out.shape == (batch, seq, P), out.shape
    assert jnp.allclose(out, ref, atol=1e-4, rtol=1e-4), "f32 mismatch vs reference"

    # 2-D input with a row count that is NOT a tile multiple (exercises the
    # masked partial last block / no-x-padding path).
    x_odd = jax.random.normal(kx2, (21, embedding_dim), jnp.float32)
    out_odd = jax.block_until_ready(
        prime_projection_encoder(x_odd, w_pad, params, p_real=p_real)
    )
    ref_odd = _reference(x_odd, w_cat, b_cat, gamma, beta)
    assert out_odd.shape == (21, P), out_odd.shape
    assert jnp.allclose(out_odd, ref_odd, atol=1e-4, rtol=1e-4), "odd-M mismatch"

    # bf16 I/O path: bf16 feeds the MXU directly, f32 accumulation/LN, bf16 out.
    x_bf = x.astype(jnp.bfloat16)
    w_bf, b_bf, g_bf, be_bf = (
        t.astype(jnp.bfloat16) for t in (w_cat, b_cat, gamma, beta)
    )
    w_pad_bf, params_bf, _ = prepare_params(w_bf, b_bf, g_bf, be_bf)
    out_bf = jax.block_until_ready(
        prime_projection_encoder(x_bf, w_pad_bf, params_bf, p_real=p_real)
    )
    ref_bf = _reference(
        x_bf.astype(jnp.float32),
        w_bf.astype(jnp.float32),
        b_bf.astype(jnp.float32),
        g_bf.astype(jnp.float32),
        be_bf.astype(jnp.float32),
    )
    assert out_bf.dtype == jnp.bfloat16
    assert out_bf.shape == (batch, seq, P), out_bf.shape
    assert jnp.allclose(out_bf.astype(jnp.float32), ref_bf, atol=3e-2, rtol=3e-2), (
        "bf16 mismatch vs reference"
    )

    print("KERNEL_OK")
</pallas_src>

<mosaic_0001>
module attributes {stable_mosaic.version = 11 : i64} {
  func.func @_prime_proj_kernel(%arg0: i32, %arg1: memref<8x32xf32, #tpu.memory_space<vmem>>, %arg2: memref<32x128xf32, #tpu.memory_space<vmem>>, %arg3: memref<4x128xf32, #tpu.memory_space<vmem>>, %arg4: memref<8x128xf32, #tpu.memory_space<vmem>>) attributes {dimension_semantics = [#tpu.dimension_semantics<parallel>], iteration_bounds = array<i64: 2>, scalar_prefetch = 0 : i64, scratch_operands = 0 : i64, tpu.core_type = #tpu.core_type<tc>, window_params = [{transform_indices = @transform_0, window_bounds = array<i64: 8, 32>}, {pipeline_mode = #tpu.pipeline_mode<synchronous>, transform_indices = @transform_1, window_bounds = array<i64: 32, 128>}, {pipeline_mode = #tpu.pipeline_mode<synchronous>, transform_indices = @transform_2, window_bounds = array<i64: 4, 128>}, {transform_indices = @transform_3, window_bounds = array<i64: 8, 128>}]} {
    %c0 = arith.constant 0 : index
    %c0_0 = arith.constant 0 : index
    %0 = vector.load %arg1[%c0, %c0_0] : memref<8x32xf32, #tpu.memory_space<vmem>>, vector<8x32xf32>
    %c0_1 = arith.constant 0 : index
    %c0_2 = arith.constant 0 : index
    %1 = vector.load %arg2[%c0_1, %c0_2] : memref<32x128xf32, #tpu.memory_space<vmem>>, vector<32x128xf32>
    %cst = arith.constant dense<0.000000e+00> : vector<8x128xf32>
    %2 = tpu.matmul %0, %1, %cst {dimension_numbers = #tpu.dot_dimension_numbers<[1], [0], [0], [1], [0, 0, 1, 1], [], []>} : vector<8x32xf32>, vector<32x128xf32>, vector<8x128xf32> -> vector<8x128xf32>
    %c0_3 = arith.constant 0 : index
    %c0_4 = arith.constant 0 : index
    %3 = vector.load %arg3[%c0_3, %c0_4] : memref<4x128xf32, #tpu.memory_space<vmem>>, vector<1x128xf32>
    %c1 = arith.constant 1 : index
    %c0_5 = arith.constant 0 : index
    %4 = vector.load %arg3[%c1, %c0_5] : memref<4x128xf32, #tpu.memory_space<vmem>>, vector<1x128xf32>
    %c2 = arith.constant 2 : index
    %c0_6 = arith.constant 0 : index
    %5 = vector.load %arg3[%c2, %c0_6] : memref<4x128xf32, #tpu.memory_space<vmem>>, vector<1x128xf32>
    %c3 = arith.constant 3 : index
    %c0_7 = arith.constant 0 : index
    %6 = vector.load %arg3[%c3, %c0_7] : memref<4x128xf32, #tpu.memory_space<vmem>>, vector<1x128xf32>
    %7 = vector.broadcast %3 : vector<1x128xf32> to vector<8x128xf32>
    %8 = arith.addf %2, %7 : vector<8x128xf32>
    %cst_8 = arith.constant dense<0.000000e+00> : vector<8xf32>
    %9 = vector.multi_reduction <add>, %8, %cst_8 [1] : vector<8x128xf32> to vector<8xf32>
    %10 = vector.shape_cast %9 : vector<8xf32> to vector<8x1xf32>
    %cst_9 = arith.constant 0.0120481923 : f32
    %11 = vector.broadcast %cst_9 : f32 to vector<8x1xf32>
    %12 = arith.mulf %10, %11 : vector<8x1xf32>
    %13 = vector.broadcast %12 : vector<8x1xf32> to vector<8x128xf32>
    %14 = arith.subf %8, %13 : vector<8x128xf32>
    %15 = vector.broadcast %6 : vector<1x128xf32> to vector<8x128xf32>
    %16 = arith.mulf %14, %15 : vector<8x128xf32>
    %17 = arith.mulf %16, %16 : vector<8x128xf32>
    %cst_10 = arith.constant dense<0.000000e+00> : vector<8xf32>
    %18 = vector.multi_reduction <add>, %17, %cst_10 [1] : vector<8x128xf32> to vector<8xf32>
    %19 = vector.shape_cast %18 : vector<8xf32> to vector<8x1xf32>
    %cst_11 = arith.constant 0.0120481923 : f32
    %20 = vector.broadcast %cst_11 : f32 to vector<8x1xf32>
    %21 = arith.mulf %19, %20 : vector<8x1xf32>
    %cst_12 = arith.constant 9.99999974E-6 : f32
    %22 = vector.broadcast %cst_12 : f32 to vector<8x1xf32>
    %23 = arith.addf %21, %22 : vector<8x1xf32>
    %24 = math.rsqrt %23 : vector<8x1xf32>
    %25 = vector.broadcast %24 : vector<8x1xf32> to vector<8x128xf32>
    %26 = arith.mulf %16, %25 : vector<8x128xf32>
    %27 = vector.broadcast %4 : vector<1x128xf32> to vector<8x128xf32>
    %28 = arith.mulf %26, %27 : vector<8x128xf32>
    %29 = vector.broadcast %5 : vector<1x128xf32> to vector<8x128xf32>
    %30 = arith.addf %28, %29 : vector<8x128xf32>
    %c0_13 = arith.constant 0 : index
    %c0_14 = arith.constant 0 : index
    %31 = vector.load %arg4[%c0_13, %c0_14] : memref<8x128xf32, #tpu.memory_space<vmem>>, vector<8x128xf32>
    tpu.vector_store %arg4[%c0_13, %c0_14], %30 {strides = array<i32>} : memref<8x128xf32, #tpu.memory_space<vmem>>, vector<8x128xf32>,
    return
  }
  func.func @transform_0(%arg0: i32) -> (i32, i32) {
    %c0_i32 = arith.constant 0 : i32
    %c0_i32_0 = arith.constant 0 : i32
    return %arg0, %c0_i32 : i32, i32
  }
  func.func @transform_1(%arg0: i32) -> (i32, i32) {
    %c0_i32 = arith.constant 0 : i32
    %c0_i32_0 = arith.constant 0 : i32
    %c0_i32_1 = arith.constant 0 : i32
    return %c0_i32, %c0_i32_0 : i32, i32
  }
  func.func @transform_2(%arg0: i32) -> (i32, i32) {
    %c0_i32 = arith.constant 0 : i32
    %c0_i32_0 = arith.constant 0 : i32
    %c0_i32_1 = arith.constant 0 : i32
    return %c0_i32, %c0_i32_0 : i32, i32
  }
  func.func @transform_3(%arg0: i32) -> (i32, i32) {
    %c0_i32 = arith.constant 0 : i32
    %c0_i32_0 = arith.constant 0 : i32
    return %arg0, %c0_i32 : i32, i32
  }
}

</mosaic_0001>

<llo_original>
// kernel: prime_projection_encoder.1
$region0: #{prime_projection_encoder.1}
  #allocation0 [shape = 'u32[]', space=smem, size = 0x4, offset = 0x4, fixed_abs, tag = 'smem constant byte address 0x4 - core index']
  #allocation1 [shape = 'u32[144,128]{1,0:T(1,128)}', space=vmem, size = 0x12000, scoped, tag = 'internal scratch']
  %s0 = inlined_call_operand.hbm [shape: f32[16,32], index: 0, kind: input, shape index: {}]
  %s1 = inlined_call_operand.hbm [shape: f32[32,128], index: 1, kind: input, shape index: {}]
  %s2 = inlined_call_operand.vmem [shape: f32[4,128], index: 2, kind: input, shape index: {}]
  %s3 = inlined_call_operand.vmem [shape: f32[16,128], index: 3, kind: output, shape index: {}]
  %s4 = sld [smem:[#allocation0]]
  $region53: #{prime_projection_encoder.1} parent=0
    _
  %s6 = ssub.s32 1, %s4
  %s7 = scalar_select 0, %s6, %s4
  $region1: #{prime_projection_encoder.1} parent=0
    #allocation2 [shape = 'u8[8192]{0}', space=vmem, size = 0x2000, scoped, tag = 'input window, operand 0']
    #allocation3 [shape = 's32[2]{0}', space=sflag, size = 0x8, scoped, tag = 'scoped memory for prime_projection_encoder.1']
    #allocation4 [shape = 'u8[16384]{0}', space=vmem, size = 0x4000, scoped, tag = 'input window, operand 1, single buffered']
    #allocation5 [shape = 's32[1]{0}', space=sflag, size = 0x4, scoped, tag = 'scoped memory for prime_projection_encoder.1']
    %8 = vsyncpa [#allocation3], 0
    %s9 = scalar_lea.sflag [#allocation3], 1
    %10 = vsyncpa %s9, 0
    %11 = vsyncpa [#allocation5], 0
    loop: start=0, step=1, limit=4
    $region2: #{prime_projection_encoder.1} parent=1 // loop_pre_header
      _
    $region3: #{prime_projection_encoder.1} parent=1 // loop_header
      %s13 = sphi 0, %s17
      %p14 = scmp.ge.s32.totalorder %s13, 4
      %s23 = sphi 0, %s25
      %s26 = sphi 0, %s23
      %s27 = sphi 0, %s26
      %s43 = sphi 0, %s27
      %s47 = sphi 0, %s47
      %s49 = sphi 0, %s47
      %s50 = sphi 0, %s49
      %s64 = sphi 0, %s50
      %s68 = sphi 0, %s68
      %s70 = sphi 0, %s68
      %s71 = sphi 0, %s70
      %s85 = sphi 0, %s71
      %s91 = sphi 0, %s93
      %s94 = sphi 0, %s91
      %s95 = sphi 0, %s94
      %s111 = sphi 0, %s95
    $region4: #{prime_projection_encoder.1} parent=1 // loop_header_branch
      %16 = sbr.rel (%p14) target = $region8
    $region5: #{prime_projection_encoder.1} parent=1 // loop_body
      %s18 = ssub.s32 %s13, 1
      %s19 = ssub.s32 %s13, 2
      %s20 = sadd.s32 %s13, 1
      %s21 = ssub.s32 %s13, %s20
      %p22 = scmp.eq.s32.totalorder %s21, 0
      %s24 = sadd.s32 %s23, 1
      %s25 = scalar_select %p22, %s23, %s24
      %p28 = pneg %p22
      %p29 = scmp.eq.s32.totalorder %s13, 1
      %p30 = por %p28, %p29
      %p31 = scmp.ne.s32.totalorder %s23, %s26
      %p32 = scmp.eq.s32.totalorder %s13, 0
      %p33 = por %p31, %p32
      %p34 = scmp.ne.s32.totalorder %s23, %s26
      %p35 = scmp.eq.s32.totalorder %s18, 1
      %p36 = por %p34, %p35
      %p37 = scmp.ne.s32.totalorder %s26, %s27
      %p38 = scmp.eq.s32.totalorder %s18, 0
      %p39 = por %p37, %p38
      %p40 = scmp.ne.s32.totalorder %s26, %s27
      %p41 = scmp.eq.s32.totalorder %s19, 1
      %p42 = por %p40, %p41
      %p44 = scmp.ne.s32.totalorder %s27, %s43
      %p45 = scmp.eq.s32.totalorder %s19, 0
      %p46 = por %p44, %p45
      %s48 = sadd.s32 %s47, 1
      %p51 = scmp.eq.s32.totalorder %s13, 1
      %p52 = scmp.ne.s32.totalorder %s47, %s49
      %p53 = scmp.eq.s32.totalorder %s13, 0
      %p54 = por %p52, %p53
      %p55 = scmp.ne.s32.totalorder %s47, %s49
      %p56 = scmp.eq.s32.totalorder %s18, 1
      %p57 = por %p55, %p56
      %p58 = scmp.ne.s32.totalorder %s49, %s50
      %p59 = scmp.eq.s32.totalorder %s18, 0
      %p60 = por %p58, %p59
      %p61 = scmp.ne.s32.totalorder %s49, %s50
      %p62 = scmp.eq.s32.totalorder %s19, 1
      %p63 = por %p61, %p62
      %p65 = scmp.ne.s32.totalorder %s50, %s64
      %p66 = scmp.eq.s32.totalorder %s19, 0
      %p67 = por %p65, %p66
      %s69 = sadd.s32 %s68, 1
      %p72 = scmp.eq.s32.totalorder %s13, 1
      %p73 = scmp.ne.s32.totalorder %s68, %s70
      %p74 = scmp.eq.s32.totalorder %s13, 0
      %p75 = por %p73, %p74
      %p76 = scmp.ne.s32.totalorder %s68, %s70
      %p77 = scmp.eq.s32.totalorder %s18, 1
      %p78 = por %p76, %p77
      %p79 = scmp.ne.s32.totalorder %s70, %s71
      %p80 = scmp.eq.s32.totalorder %s18, 0
      %p81 = por %p79, %p80
      %p82 = scmp.ne.s32.totalorder %s70, %s71
      %p83 = scmp.eq.s32.totalorder %s19, 1
      %p84 = por %p82, %p83
      %p86 = scmp.ne.s32.totalorder %s71, %s85
      %p87 = scmp.eq.s32.totalorder %s19, 0
      %p88 = por %p86, %p87
      %s89 = ssub.s32 %s13, %s20
      %p90 = scmp.eq.s32.totalorder %s89, 0
      %s92 = sadd.s32 %s91, 1
      %s93 = scalar_select %p90, %s91, %s92
      %p96 = pneg %p90
      %p97 = scmp.eq.s32.totalorder %s13, 1
      %p98 = por %p96, %p97
      %p99 = scmp.ne.s32.totalorder %s91, %s94
      %p100 = scmp.eq.s32.totalorder %s13, 0
      %p101 = por %p99, %p100
      %p102 = scmp.ne.s32.totalorder %s91, %s94
      %p103 = scmp.eq.s32.totalorder %s18, 1
      %p104 = por %p102, %p103
      %p105 = scmp.ne.s32.totalorder %s94, %s95
      %p106 = scmp.eq.s32.totalorder %s18, 0
      %p107 = por %p105, %p106
      %p108 = scmp.ne.s32.totalorder %s94, %s95
      %p109 = scmp.eq.s32.totalorder %s19, 1
      %p110 = por %p108, %p109
      %p112 = scmp.ne.s32.totalorder %s95, %s111
      %p113 = scmp.eq.s32.totalorder %s19, 0
      %p114 = por %p112, %p113
      %p115 = scmp.le.s32.totalorder 1, %s13
      %p116 = scmp.lt.s32.totalorder %s13, 3
      %p117 = pnand %p115, %p116
      %p118 = pneg %p117
      // Predicated region
      $region9: #{prime_projection_encoder.1} parent=5 // pred_check
        _
      $region10: #{prime_projection_encoder.1} parent=5 // pred_check_branch
        %120 = sbr.rel (%p117) target = $region12
      $region11: #{prime_projection_encoder.1} parent=5 // pred_region
        %s121 = ssub.s32 %s13, 1
        // Predicated region
        $region13: #{prime_projection_encoder.1} parent=11 // pred_check
          %p122 = pneg %p60
        $region14: #{prime_projection_encoder.1} parent=11 // pred_check_branch
          %124 = sbr.rel (%p122) target = $region16
        $region15: #{prime_projection_encoder.1} parent=11 // pred_region
          %s126 = ssub.s32 512, 512
          %127 = vsyncadd [#allocation5], %s126
          %s128 = sshll.u32 [#allocation4], 4
          %s129 = int_to_ptr.vmem [resolvable:$true] %s128
          %134 = dma.hbm_to_vmem [thread:$0]  %s1, 512, %s129, [#allocation5], 128, 128, 8
        $region16: #{prime_projection_encoder.1} parent=11 // pred_fallthru
          _
        // Predicated region
        $region17: #{prime_projection_encoder.1} parent=11 // pred_check
          %p135 = pneg %p81
        $region18: #{prime_projection_encoder.1} parent=11 // pred_check_branch
          %137 = sbr.rel (%p135) target = $region20
        $region19: #{prime_projection_encoder.1} parent=11 // pred_region
          _
        $region20: #{prime_projection_encoder.1} parent=11 // pred_fallthru
          _
      $region12: #{prime_projection_encoder.1} parent=5 // pred_fallthru
        _
      %p138 = scmp.lt.s32.totalorder %s13, 2
      // Predicated region
      $region21: #{prime_projection_encoder.1} parent=5 // pred_check
        %p139 = pneg %p138
      $region22: #{prime_projection_encoder.1} parent=5 // pred_check_branch
        %141 = sbr.rel (%p139) target = $region24
      $region23: #{prime_projection_encoder.1} parent=5 // pred_region
        // Predicated region
        $region25: #{prime_projection_encoder.1} parent=23 // pred_check
          %p142 = pneg %p33
        $region26: #{prime_projection_encoder.1} parent=23 // pred_check_branch
          %144 = sbr.rel (%p142) target = $region28
        $region27: #{prime_projection_encoder.1} parent=23 // pred_region
          %s145 = sand.u32 %s23, 1
          %s146 = scalar_lea.sflag [#allocation3], %s145
          %s147 = sand.u32 %s23, 1
          %s148 = smul.addr %s147, 8
          %s149 = scalar_lea.vmem [#allocation2], %s148
          %s151 = ssub.s32 128, 128
          %152 = vsyncadd %s146, %s151
          %s153 = smul.addr %s13, 128
          %s154 = scalar_lea.hbm %s0, %s153
          %s156 = sshll.u32 %s149, 4
          %s157 = int_to_ptr.vmem [resolvable:$true] %s156
          %159 = dma.hbm_to_vmem [thread:$0]  %s154, 128, %s157, %s146
        $region28: #{prime_projection_encoder.1} parent=23 // pred_fallthru
          _
      $region24: #{prime_projection_encoder.1} parent=5 // pred_fallthru
        _
      %p160 = scmp.le.s32.totalorder 1, %s13
      %p161 = scmp.lt.s32.totalorder %s13, 3
      %p162 = pnand %p160, %p161
      %p163 = pneg %p162
      // Predicated region
      $region29: #{prime_projection_encoder.1} parent=5 // pred_check
        _
      $region30: #{prime_projection_encoder.1} parent=5 // pred_check_branch
        %165 = sbr.rel (%p162) target = $region32
      $region31: #{prime_projection_encoder.1} parent=5 // pred_region
        %s166 = ssub.s32 %s13, 1
        %s167 = sand.u32 %s26, 1
        %s168 = scalar_lea.sflag [#allocation3], %s167
        %s169 = sand.u32 %s26, 1
        %s170 = smul.addr %s169, 8
        %s171 = scalar_lea.vmem [#allocation2], %s170
        // Predicated region
        $region33: #{prime_projection_encoder.1} parent=31 // pred_check
          %p172 = pneg %p39
        $region34: #{prime_projection_encoder.1} parent=31 // pred_check_branch
          %174 = sbr.rel (%p172) target = $region36
        $region35: #{prime_projection_encoder.1} parent=31 // pred_region
          %175 = dma.done %s168, 128
        $region36: #{prime_projection_encoder.1} parent=31 // pred_fallthru
          _
        // Predicated region
        $region37: #{prime_projection_encoder.1} parent=31 // pred_check
          %p176 = pneg %p60
        $region38: #{prime_projection_encoder.1} parent=31 // pred_check_branch
          %178 = sbr.rel (%p176) target = $region40
        $region39: #{prime_projection_encoder.1} parent=31 // pred_region
          %179 = dma.done [#allocation5], 512
        $region40: #{prime_projection_encoder.1} parent=31 // pred_fallthru
          _
        %s180 = sand.u32 %s26, 1
        %s181 = scalar_lea.sflag [#allocation3], %s180
        %s182 = sand.u32 %s26, 1
        %s183 = smul.addr %s182, 8
        %s184 = scalar_lea.vmem [#allocation2], %s183
        %p185 = pneg %p39
        %p186 = pneg %p36
        %p187 = pneg %p60
        %p188 = pneg %p57
        %p189 = pneg %p81
        %p190 = pneg %p78
        %p191 = pneg %p107
        %p192 = pneg %p104
        %p193 = scmp.lt.s32.totalorder %s18, 1
        %s194 = scalar_select %p193, %s18, 1
        %s195 = smul.addr %s194, 8
        %s196 = scalar_lea.vmem %s3, %s195
        %p197 = scmp.lt.s32.totalorder %s18, 1
        %s198 = scalar_select %p197, %s18, 1
        %s199 = smul.addr %s198, 8
        %s200 = scalar_lea.vmem %s3, %s199
        %v201 = vld [vmem:[%s171] sm:$0xff]
        %v202 = vld [vmem:[#allocation4] sm:$0xff]
        %v203 = vld [vmem:[#allocation4 + $0x8] sm:$0xff]
        %v204 = vld [vmem:[#allocation4 + $0x10] sm:$0xff]
        %v205 = vld [vmem:[#allocation4 + $0x18] sm:$0xff]
        %v206 = vld [vmem:[%s2] sm:$0x1]
        %v207 = vld [vmem:[%s2 + $0x1] sm:$0x1]
        %v208 = vld [vmem:[%s2 + $0x2] sm:$0x1]
        %v209 = vld [vmem:[%s2 + $0x3] sm:$0x1]
        %v210 = vlaneseq
        %v211 = vshrl.u32 %v210, 7
        %v212 = vsub.s32 0, %v211
        %v213 = vrot.slane %v206, %v212
        %vm214 = vcmask 261120
        %v216 = vsel %vm214, %v201, 0
        %218 = vmatprep.subr.mxu0 0.0
        %219 = vmatpush1.msra.mxu0 %v202
        %220 = vmatprep.subr.mxu0 0.0
        %221 = vmatpush1.msra.mxu0 %v203
        %222 = vmatprep.subr.mxu0 0.0
        %223 = vmatpush1.msra.mxu0 %v204
        %224 = vmatprep.subr.mxu0 0.0
        %225 = vmatpush1.msra.mxu0 %v205
        %226 = vmatprep.subr.mxu0 0.0
        %227 = vmatpush1.msra.mxu0 0.0
        %228 = vmatprep.subr.mxu0 0.0
        %229 = vmatpush1.msra.mxu0 0.0
        %230 = vmatprep.subr.mxu0 0.0
        %231 = vmatpush1.msra.mxu0 0.0
        %232 = vmatprep.subr.mxu0 0.0
        %233 = vmatpush1.msra.mxu0 0.0
        %234 = vmatprep.subr.mxu0 0.0
        %235 = vmatpush1.msra.mxu0 0.0
        %236 = vmatprep.subr.mxu0 0.0
        %237 = vmatpush1.msra.mxu0 0.0
        %238 = vmatprep.subr.mxu0 0.0
        %239 = vmatpush1.msra.mxu0 0.0
        %240 = vmatprep.subr.mxu0 0.0
        %241 = vmatpush1.msra.mxu0 0.0
        %242 = vmatprep.subr.mxu0 0.0
        %243 = vmatpush1.msra.mxu0 0.0
        %244 = vmatprep.subr.mxu0 0.0
        %245 = vmatpush1.msra.mxu0 0.0
        %246 = vmatprep.subr.mxu0 0.0
        %247 = vmatpush1.msra.mxu0 0.0
        %248 = vmatprep.subr.mxu0 0.0
        %249 = vmatpush1.msra.mxu0 0.0
        %250 = vmatprep.subr.mxu0 0.0
        %251 = vmatpush1.msra.mxu0 0.0
        %252 = vmatprep.subr.mxu0 0.0
        %253 = vmatpush1.msra.mxu0 0.0
        %254 = vmatprep.subr.mxu0 0.0
        %255 = vmatpush1.msra.mxu0 0.0
        %256 = vmatprep.subr.mxu0 0.0
        %257 = vmatpush1.msra.mxu0 0.0
        %258 = vmatprep.subr.mxu0 0.0
        %259 = vmatpush1.msra.mxu0 0.0
        %260 = vmatprep.subr.mxu0 0.0
        %261 = vmatpush1.msra.mxu0 0.0
        %262 = vmatprep.subr.mxu0 0.0
        %263 = vmatpush1.msra.mxu0 0.0
        %264 = vmatprep.subr.mxu0 0.0
        %265 = vmatpush1.msra.mxu0 0.0
        %266 = vmatprep.subr.mxu0 0.0
        %267 = vmatpush1.msra.mxu0 0.0
        %268 = vmatprep.subr.mxu0 0.0
        %269 = vmatpush1.msra.mxu0 0.0
        %270 = vmatprep.subr.mxu0 0.0
        %271 = vmatpush1.msra.mxu0 0.0
        %272 = vmatprep.subr.mxu0 0.0
        %273 = vmatpush1.msra.mxu0 0.0
        %274 = vmatprep.subr.mxu0 0.0
        %275 = vmatpush1.msra.mxu0 0.0
        %276 = vmatprep.subr.mxu0 0.0
        %277 = vmatpush1.msra.mxu0 0.0
        %278 = vmatprep.subr.mxu0 0.0
        %279 = vmatpush1.msra.mxu0 0.0
        %280 = vmatprep.subr.mxu0 0.0
        %281 = vmatpush1.msra.mxu0 0.0
        %282 = vmatprep.mubr.f32.mxu0 0.0
        %283 = vmatmul.mubr.f32.gmra.mrb[0].mxu0 %v216
        %v284 = vpop.f32.mrb[0].mxu0
        %v285 = vadd.f32 %v213, %v284
        %v286 = vpop.f32.mrb[0].mxu0
        %287 = vdwg.mxu0
        %288 = vadd.xlane.f32.xlu0 %v285
        %v289 = vpop.xlane.xlu0 %288
        %v290 = vmul.f32 %v289, 0.012048192
        %v291 = vsub.f32 %v285, %v290
        %v292 = vlaneseq
        %v293 = vshrl.u32 %v292, 7
        %v294 = vsub.s32 0, %v293
        %v295 = vrot.slane %v209, %v294
        %v296 = vmul.f32 %v291, %v295
        %v297 = vmul.f32 %v296, %v296
        %298 = vadd.xlane.f32.xlu0 %v297
        %v299 = vpop.xlane.xlu0 %298
        %v300 = vmul.f32 %v299, 0.012048192
        %v301 = vadd.f32 %v300, 1e-05
        %v302 = vrsqrt.pop %v301
        %v303 = vmul.f32 %v296, %v302
        %v304 = vlaneseq
        %v305 = vshrl.u32 %v304, 7
        %v306 = vsub.s32 0, %v305
        %v307 = vrot.slane %v207, %v306
        %v308 = vmul.f32 %v303, %v307
        %v309 = vlaneseq
        %v310 = vshrl.u32 %v309, 7
        %v311 = vsub.s32 0, %v310
        %v312 = vrot.slane %v208, %v311
        %v313 = vadd.f32 %v308, %v312
        %314 = vst [vmem:[%s200] sm:$0xff] %v313
        %p315 = scmp.lt.s32.totalorder %s18, 1
        %s316 = scalar_select %p315, %s18, 1
        %s317 = smul.addr %s316, 8
        %s318 = scalar_lea.vmem %s3, %s317
        // Predicated region
        $region41: #{prime_projection_encoder.1} parent=31 // pred_check
          %p319 = pneg %p104
        $region42: #{prime_projection_encoder.1} parent=31 // pred_check_branch
          %321 = sbr.rel (%p319) target = $region44
        $region43: #{prime_projection_encoder.1} parent=31 // pred_region
          _
        $region44: #{prime_projection_encoder.1} parent=31 // pred_fallthru
          _
      $region32: #{prime_projection_encoder.1} parent=5 // pred_fallthru
        _
      %p322 = scmp.le.s32.totalorder 2, %s13
      // Predicated region
      $region45: #{prime_projection_encoder.1} parent=5 // pred_check
        %p323 = pneg %p322
      $region46: #{prime_projection_encoder.1} parent=5 // pred_check_branch
        %325 = sbr.rel (%p323) target = $region48
      $region47: #{prime_projection_encoder.1} parent=5 // pred_region
        %s326 = ssub.s32 %s13, 2
        // Predicated region
        $region49: #{prime_projection_encoder.1} parent=47 // pred_check
          %p327 = pneg %p110
        $region50: #{prime_projection_encoder.1} parent=47 // pred_check_branch
          %329 = sbr.rel (%p327) target = $region52
        $region51: #{prime_projection_encoder.1} parent=47 // pred_region
          %p330 = scmp.lt.s32.totalorder %s19, 1
          %s331 = scalar_select %p330, %s19, 1
          %s332 = smul.addr %s331, 8
          %s333 = scalar_lea.vmem %s3, %s332
        $region52: #{prime_projection_encoder.1} parent=47 // pred_fallthru
          _
      $region48: #{prime_projection_encoder.1} parent=5 // pred_fallthru
        _
    $region6: #{prime_projection_encoder.1} parent=1 // loop_footer
      %s17 = sadd.s32 1, %s13
    $region7: #{prime_projection_encoder.1} parent=1 // loop_footer_branch
      %12 = sbr.rel target = $region3
    $region8: #{prime_projection_encoder.1} parent=1 // loop_exit
      _
    %334 = vsyncpa [#allocation3], 1
    %s335 = scalar_lea.sflag [#allocation3], 1
    %336 = vsyncpa %s335, 1
    %337 = vsyncpa [#allocation5], 1

</llo_original>
